<compile_context>
chip_gen: v5e
topology: v5e:2x2
jax: 0.10.0
libtpu: 0.0.40
codegen_flags: <defaults>
</compile_context>

<pallas_src>
import math

import jax
import jax.numpy as jnp
from jax.experimental import pallas as pl
from jax.experimental.pallas import tpu as pltpu


def _ntn_kernel(e1_ref, e2_ref, wbil_ref, wblk_ref, bias_ref, out_ref):
    """One batch tile.

    e1_ref / e2_ref : (bb, D)    embeddings, batch on sublanes (HBM layout)
    wbil_ref        : (T, D*D)   bilinear weight; W[i, j, t] at column i*D + j
    wblk_ref        : (T, 2D)    block weight (module layout, no transpose)
    bias_ref        : (T, 1)     bias column (broadcasts over the lane/batch axis)
    out_ref         : (bb, T)
    """
    cdt = wbil_ref.dtype
    # Batch -> lanes (XLU transpose).  Everything downstream is lane-dense in
    # batch, so the MXU output width is bb and the reshape below is free.
    e1t = e1_ref[...].T.astype(cdt)                       # (D, bb)
    e2t = e2_ref[...].T.astype(cdt)                       # (D, bb)
    D, bb = e1t.shape

    # Bilinear term via outer product: outer[i*D + j, b] = e1[b, i] * e2[b, j].
    # Merging the two leading (non-minor) dims is a zero-cost view.
    outer = (e1t[:, None, :] * e2t[None, :, :]).reshape(D * D, bb)

    # scoring^T (T, bb) = W_flat^T (T, D*D) @ outer (D*D, bb), f32 accumulate.
    acc = jnp.dot(wbil_ref[...], outer, preferred_element_type=jnp.float32)

    # block term: Wb (T, 2D) @ [e1; e2] (2D, bb).  The (2D, bb) concat is tiny.
    x12 = jnp.concatenate([e1t, e2t], axis=0)             # (2D, bb)
    acc = acc + jnp.dot(wblk_ref[...], x12, preferred_element_type=jnp.float32)

    acc = acc + bias_ref[...]                              # (T, 1) lane-broadcast
    # ReLU, then one small transpose back so the output array stays (B, T).
    out_ref[...] = jnp.maximum(acc, 0.0).T.astype(out_ref.dtype)


def prepare_ntn_params(weight_matrix, weight_matrix_block, bias,
                       *, compute_dtype=jnp.float32):
    """One-time, hoisted parameter prep -> matmul-ready slabs.

    weight_matrix: (D, D, T); weight_matrix_block: (T, 2D); bias: (T, 1).
    compute_dtype=jnp.bfloat16 enables the bf16 MXU/VALU path (v6e/v7x);
    accumulation stays f32 either way.
    """
    D = weight_matrix.shape[0]
    T = weight_matrix.shape[-1]
    # Row-major flatten: W[i, j, t] -> row i*D + j, then transpose to (T, D*D).
    w_bil_t = jnp.transpose(weight_matrix.reshape(D * D, T)).astype(compute_dtype)
    w_blk = weight_matrix_block.astype(compute_dtype)      # (T, 2D), as stored
    bias_col = bias.reshape(T, 1).astype(jnp.float32)       # f32 epilogue add
    return {"w_bil_t": w_bil_t, "w_blk": w_blk, "bias_col": bias_col}


def ntn_forward(e1, e2, params, *, block_b=1024):
    """Forward pass.  e1, e2: (B, D) f32.  Returns (B, T) = relu(e1 W e2 + Wb[e1;e2] + b)."""
    B, D = e1.shape
    T, DD = params["w_bil_t"].shape
    assert DD == D * D and e2.shape == (B, D)
    itemsize = params["w_bil_t"].dtype.itemsize

    # ---- batch tile: VMEM-budgeted, MXU-width aligned ----------------------
    # Per-batch-element VMEM bytes: double-buffered, lane-padded e1/e2/out
    # tiles (f32) + the transposed copies and the (D*D, bb) outer intermediate.
    per_b = (2 * 2 * max(D, 128) * 4          # e1, e2 tiles (x2 buffers each)
             + 2 * max(T, 128) * 4            # out tile (x2 buffers)
             + (D * D + 4 * D) * itemsize)    # outer + e1^T/e2^T + [e1;e2]
    budget = 24 * 2 ** 20                     # headroom inside v7x's 32 MiB scoped default
    bb_cap = max(256, (budget // per_b) // 256 * 256)
    bb = min(block_b, bb_cap)
    bb = max(256, (bb // 256) * 256)          # multiple of 256 fills v6e/v7x MXU columns
    b8 = max(8, -(-B // 8) * 8)               # batch rounded up to the sublane size
    if b8 <= bb:
        bb = b8                                # whole batch in a single tile
    num_tiles = pl.cdiv(B, bb)                 # ragged last tile: Pallas clips reads/writes

    weight_bytes = (params["w_bil_t"].size + params["w_blk"].size) * itemsize \
        + params["bias_col"].size * 4
    vmem_est = int(bb * per_b + 2 * weight_bytes + (2 << 20))
    vmem_limit = int(min(max(vmem_est, 32 * 2 ** 20), 64 * 2 ** 20))

    return pl.pallas_call(
        _ntn_kernel,
        out_shape=jax.ShapeDtypeStruct((B, T), e1.dtype),
        grid_spec=pltpu.PrefetchScalarGridSpec(
            num_scalar_prefetch=0,
            grid=(num_tiles,),
            in_specs=[
                pl.BlockSpec((bb, D), lambda i: (i, 0)),        # e1 tile
                pl.BlockSpec((bb, D), lambda i: (i, 0)),        # e2 tile
                pl.BlockSpec((T, D * D), lambda i: (0, 0)),     # bilinear W (resident)
                pl.BlockSpec((T, 2 * D), lambda i: (0, 0)),     # block W (resident)
                pl.BlockSpec((T, 1), lambda i: (0, 0)),         # bias (resident)
            ],
            out_specs=pl.BlockSpec((bb, T), lambda i: (i, 0)),
        ),
        compiler_params=pltpu.CompilerParams(
            dimension_semantics=("parallel",),
            vmem_limit_bytes=vmem_limit,
        ),
    )(e1, e2, params["w_bil_t"], params["w_blk"], params["bias_col"])


def _orthogonal(key, shape):
    """Deterministic stand-in for torch.nn.init.orthogonal_ (flattens trailing dims)."""
    rows = shape[0]
    cols = math.prod(shape[1:])
    n, m = max(rows, cols), min(rows, cols)
    a = jax.random.normal(key, (n, m), dtype=jnp.float32)
    q, r = jnp.linalg.qr(a)
    q = q * jnp.sign(jnp.diag(r))            # sign-fix for determinism
    if rows < cols:
        q = q.T
    return q[:rows, :cols].reshape(shape)


def reference(e1, e2, W, Wb, bias):
    """Pure-JAX transcription of the PyTorch forward for verification."""
    B, D = e1.shape
    T = W.shape[-1]
    scoring = (e1 @ W.reshape(D, D * T)).reshape(B, D, T).transpose(0, 2, 1)
    scoring = jnp.matmul(scoring, e2.reshape(B, D, 1)).reshape(B, T)
    combined = jnp.concatenate([e1, e2], axis=1)
    block = (Wb @ combined.T).T
    return jax.nn.relu(scoring + block + bias.reshape(-1))


if __name__ == "__main__":
    B = 8            # batch
    D = 32           # input_features
    T = 16           # tensor_neurons

    key = jax.random.PRNGKey(0)
    k1, k2, kw, kb, kbias = jax.random.split(key, 5)

    e1 = jax.random.normal(k1, (B, D), dtype=jnp.float32)
    e2 = jax.random.normal(k2, (B, D), dtype=jnp.float32)

    weight_matrix = _orthogonal(kw, (D, D, T))          # (D, D, T)
    weight_matrix_block = _orthogonal(kb, (T, 2 * D))   # (T, 2D)
    bias = _orthogonal(kbias, (T, 1))                   # (T, 1)

    # Parameter prep is hoisted (done once, not per forward call).
    params = prepare_ntn_params(weight_matrix, weight_matrix_block, bias)

    out = ntn_forward(e1, e2, params)
    out = jax.block_until_ready(out)

    ref = reference(e1, e2, weight_matrix, weight_matrix_block, bias)
    assert out.shape == (B, T)
    assert jnp.allclose(out, ref, rtol=1e-5, atol=1e-5), "Pallas output mismatch vs reference"

    print("KERNEL_OK")
</pallas_src>

<mosaic_0001>
module attributes {stable_mosaic.version = 11 : i64} {
  func.func @_ntn_kernel(%arg0: i32, %arg1: memref<8x32xf32, #tpu.memory_space<vmem>>, %arg2: memref<8x32xf32, #tpu.memory_space<vmem>>, %arg3: memref<16x1024xf32, #tpu.memory_space<vmem>>, %arg4: memref<16x64xf32, #tpu.memory_space<vmem>>, %arg5: memref<16x1xf32, #tpu.memory_space<vmem>>, %arg6: memref<8x16xf32, #tpu.memory_space<vmem>>) attributes {dimension_semantics = [#tpu.dimension_semantics<parallel>], iteration_bounds = array<i64: 1>, scalar_prefetch = 0 : i64, scratch_operands = 0 : i64, tpu.core_type = #tpu.core_type<tc>, window_params = [{transform_indices = @transform_0, window_bounds = array<i64: 8, 32>}, {transform_indices = @transform_1, window_bounds = array<i64: 8, 32>}, {pipeline_mode = #tpu.pipeline_mode<synchronous>, transform_indices = @transform_2, window_bounds = array<i64: 16, 1024>}, {pipeline_mode = #tpu.pipeline_mode<synchronous>, transform_indices = @transform_3, window_bounds = array<i64: 16, 64>}, {pipeline_mode = #tpu.pipeline_mode<synchronous>, transform_indices = @transform_4, window_bounds = array<i64: 16, 1>}, {transform_indices = @transform_5, window_bounds = array<i64: 8, 16>}]} {
    %c0 = arith.constant 0 : index
    %c0_0 = arith.constant 0 : index
    %0 = vector.load %arg1[%c0, %c0_0] : memref<8x32xf32, #tpu.memory_space<vmem>>, vector<8x32xf32>
    %1 = tpu.transpose %0, [1, 0] : vector<8x32xf32> -> vector<32x8xf32>
    %c0_1 = arith.constant 0 : index
    %c0_2 = arith.constant 0 : index
    %2 = vector.load %arg2[%c0_1, %c0_2] : memref<8x32xf32, #tpu.memory_space<vmem>>, vector<8x32xf32>
    %3 = tpu.transpose %2, [1, 0] : vector<8x32xf32> -> vector<32x8xf32>
    %4 = vector.shape_cast %1 : vector<32x8xf32> to vector<32x1x8xf32>
    %5 = vector.shape_cast %3 : vector<32x8xf32> to vector<1x32x8xf32>
    %6 = vector.broadcast %4 : vector<32x1x8xf32> to vector<32x32x8xf32>
    %7 = vector.broadcast %5 : vector<1x32x8xf32> to vector<32x32x8xf32>
    %8 = arith.mulf %6, %7 : vector<32x32x8xf32>
    %9 = vector.shape_cast %8 : vector<32x32x8xf32> to vector<1024x8xf32>
    %c0_3 = arith.constant 0 : index
    %c0_4 = arith.constant 0 : index
    %10 = vector.load %arg3[%c0_3, %c0_4] : memref<16x1024xf32, #tpu.memory_space<vmem>>, vector<16x1024xf32>
    %cst = arith.constant dense<0.000000e+00> : vector<16x8xf32>
    %11 = tpu.matmul %10, %9, %cst {dimension_numbers = #tpu.dot_dimension_numbers<[1], [0], [0], [1], [0, 0, 1, 1], [], []>} : vector<16x1024xf32>, vector<1024x8xf32>, vector<16x8xf32> -> vector<16x8xf32>
    %12 = tpu.concatenate %1, %3 in 0 : vector<32x8xf32>, vector<32x8xf32> -> vector<64x8xf32>
    %c0_5 = arith.constant 0 : index
    %c0_6 = arith.constant 0 : index
    %13 = vector.load %arg4[%c0_5, %c0_6] : memref<16x64xf32, #tpu.memory_space<vmem>>, vector<16x64xf32>
    %cst_7 = arith.constant dense<0.000000e+00> : vector<16x8xf32>
    %14 = tpu.matmul %13, %12, %cst_7 {dimension_numbers = #tpu.dot_dimension_numbers<[1], [0], [0], [1], [0, 0, 1, 1], [], []>} : vector<16x64xf32>, vector<64x8xf32>, vector<16x8xf32> -> vector<16x8xf32>
    %15 = arith.addf %11, %14 : vector<16x8xf32>
    %c0_8 = arith.constant 0 : index
    %c0_9 = arith.constant 0 : index
    %16 = vector.load %arg5[%c0_8, %c0_9] : memref<16x1xf32, #tpu.memory_space<vmem>>, vector<16x1xf32>
    %17 = vector.broadcast %16 : vector<16x1xf32> to vector<16x8xf32>
    %18 = arith.addf %15, %17 : vector<16x8xf32>
    %cst_10 = arith.constant 0.000000e+00 : f32
    %19 = vector.broadcast %cst_10 : f32 to vector<16x8xf32>
    %20 = arith.maximumf %18, %19 : vector<16x8xf32>
    %21 = tpu.transpose %20, [1, 0] : vector<16x8xf32> -> vector<8x16xf32>
    %c0_11 = arith.constant 0 : index
    %c0_12 = arith.constant 0 : index
    %22 = vector.load %arg6[%c0_11, %c0_12] : memref<8x16xf32, #tpu.memory_space<vmem>>, vector<8x16xf32>
    tpu.vector_store %arg6[%c0_11, %c0_12], %21 {strides = array<i32>} : memref<8x16xf32, #tpu.memory_space<vmem>>, vector<8x16xf32>,
    return
  }
  func.func @transform_0(%arg0: i32) -> (i32, i32) {
    %c0_i32 = arith.constant 0 : i32
    %c0_i32_0 = arith.constant 0 : i32
    return %arg0, %c0_i32 : i32, i32
  }
  func.func @transform_1(%arg0: i32) -> (i32, i32) {
    %c0_i32 = arith.constant 0 : i32
    %c0_i32_0 = arith.constant 0 : i32
    return %arg0, %c0_i32 : i32, i32
  }
  func.func @transform_2(%arg0: i32) -> (i32, i32) {
    %c0_i32 = arith.constant 0 : i32
    %c0_i32_0 = arith.constant 0 : i32
    %c0_i32_1 = arith.constant 0 : i32
    return %c0_i32, %c0_i32_0 : i32, i32
  }
  func.func @transform_3(%arg0: i32) -> (i32, i32) {
    %c0_i32 = arith.constant 0 : i32
    %c0_i32_0 = arith.constant 0 : i32
    %c0_i32_1 = arith.constant 0 : i32
    return %c0_i32, %c0_i32_0 : i32, i32
  }
  func.func @transform_4(%arg0: i32) -> (i32, i32) {
    %c0_i32 = arith.constant 0 : i32
    %c0_i32_0 = arith.constant 0 : i32
    %c0_i32_1 = arith.constant 0 : i32
    return %c0_i32, %c0_i32_0 : i32, i32
  }
  func.func @transform_5(%arg0: i32) -> (i32, i32) {
    %c0_i32 = arith.constant 0 : i32
    %c0_i32_0 = arith.constant 0 : i32
    return %arg0, %c0_i32 : i32, i32
  }
}

</mosaic_0001>

<llo_original>
// kernel: tpu_custom_call.1
$region0: #{tpu_custom_call.1}
  #allocation0 [shape = 'u32[]', space=smem, size = 0x4, offset = 0x4, fixed_abs, tag = 'smem constant byte address 0x4 - core index']
  #allocation1 [shape = 'u32[72,128]{1,0:T(1,128)}', space=vmem, size = 0x9000, scoped, tag = 'internal scratch']
  %s0 = inlined_call_operand.hbm [shape: f32[8,32], index: 0, kind: input, shape index: {}]
  %s1 = inlined_call_operand.hbm [shape: f32[8,32], index: 1, kind: input, shape index: {}]
  %s2 = inlined_call_operand.hbm [shape: f32[16,1024], index: 2, kind: input, shape index: {}]
  %s3 = inlined_call_operand.vmem [shape: f32[16,64], index: 3, kind: input, shape index: {}]
  %s4 = inlined_call_operand.vmem [shape: f32[16,1], index: 4, kind: input, shape index: {}]
  %s5 = inlined_call_operand.hbm [shape: f32[8,16], index: 5, kind: output, shape index: {}]
  %s6 = sld [smem:[#allocation0]]
  $region42: #{tpu_custom_call.1} parent=0
    _
  %s8 = ssub.s32 1, %s6
  %s9 = scalar_select 0, %s8, %s6
  $region1: #{tpu_custom_call.1} parent=0
    #allocation2 [shape = 'u8[4096]{0}', space=vmem, size = 0x1000, scoped, tag = 'input window, operand 0, single buffered']
    #allocation3 [shape = 's32[1]{0}', space=sflag, size = 0x4, scoped, tag = 'scoped memory for tpu_custom_call.1']
    #allocation4 [shape = 's32[1]{0}', space=sflag, size = 0x4, scoped, tag = 'scoped memory for tpu_custom_call.1']
    #allocation5 [shape = 'u8[4096]{0}', space=vmem, size = 0x1000, scoped, tag = 'input window, operand 1, single buffered']
    #allocation6 [shape = 's32[1]{0}', space=sflag, size = 0x4, scoped, tag = 'scoped memory for tpu_custom_call.1']
    #allocation7 [shape = 'u8[65536]{0}', space=vmem, size = 0x10000, scoped, tag = 'input window, operand 2, single buffered']
    #allocation8 [shape = 'u8[4096]{0}', space=vmem, size = 0x1000, scoped, tag = 'output window, operand 0, single buffered']
    %10 = vsyncpa [#allocation3], 0
    %11 = vsyncpa [#allocation6], 0
    %12 = vsyncpa [#allocation4], 0
    // Predicated region
    $region2: #{tpu_custom_call.1} parent=1 // pred_check
      _
    $region3: #{tpu_custom_call.1} parent=1 // pred_check_branch
      %14 = sbr.rel (0) target = $region5
    $region4: #{tpu_custom_call.1} parent=1 // pred_region
      %16 = vsyncadd [#allocation3], 0
      %s18 = sshll.u32 %s0, 4
      %s19 = int_to_ptr.hbm [resolvable:$true] %s18
      %s20 = sshll.u32 [#allocation2], 4
      %s21 = int_to_ptr.vmem [resolvable:$true] %s20
      %23 = dma.hbm_to_vmem [thread:$0]  %s19, 128, %s21, [#allocation3]
    $region5: #{tpu_custom_call.1} parent=1 // pred_fallthru
      _
    // Predicated region
    $region6: #{tpu_custom_call.1} parent=1 // pred_check
      _
    $region7: #{tpu_custom_call.1} parent=1 // pred_check_branch
      %25 = sbr.rel (0) target = $region9
    $region8: #{tpu_custom_call.1} parent=1 // pred_region
      %27 = vsyncadd [#allocation6], 0
      %s29 = sshll.u32 %s1, 4
      %s30 = int_to_ptr.hbm [resolvable:$true] %s29
      %s31 = sshll.u32 [#allocation5], 4
      %s32 = int_to_ptr.vmem [resolvable:$true] %s31
      %34 = dma.hbm_to_vmem [thread:$0]  %s30, 128, %s32, [#allocation6]
    $region9: #{tpu_custom_call.1} parent=1 // pred_fallthru
      _
    // Predicated region
    $region10: #{tpu_custom_call.1} parent=1 // pred_check
      _
    $region11: #{tpu_custom_call.1} parent=1 // pred_check_branch
      %36 = sbr.rel (0) target = $region13
    $region12: #{tpu_custom_call.1} parent=1 // pred_region
      %38 = vsyncadd [#allocation6], 0
      %s39 = sshll.u32 %s2, 4
      %s40 = int_to_ptr.hbm [resolvable:$true] %s39
      %s41 = sshll.u32 [#allocation7], 4
      %s42 = int_to_ptr.vmem [resolvable:$true] %s41
      %47 = dma.hbm_to_vmem [thread:$0]  %s40, 2048, %s42, [#allocation6], 1024, 1024, 64
    $region13: #{tpu_custom_call.1} parent=1 // pred_fallthru
      _
    // Predicated region
    $region14: #{tpu_custom_call.1} parent=1 // pred_check
      _
    $region15: #{tpu_custom_call.1} parent=1 // pred_check_branch
      %49 = sbr.rel (0) target = $region17
    $region16: #{tpu_custom_call.1} parent=1 // pred_region
      _
    $region17: #{tpu_custom_call.1} parent=1 // pred_fallthru
      _
    // Predicated region
    $region18: #{tpu_custom_call.1} parent=1 // pred_check
      _
    $region19: #{tpu_custom_call.1} parent=1 // pred_check_branch
      %51 = sbr.rel (0) target = $region21
    $region20: #{tpu_custom_call.1} parent=1 // pred_region
      _
    $region21: #{tpu_custom_call.1} parent=1 // pred_fallthru
      _
    // Predicated region
    $region22: #{tpu_custom_call.1} parent=1 // pred_check
      _
    $region23: #{tpu_custom_call.1} parent=1 // pred_check_branch
      %53 = sbr.rel (0) target = $region25
    $region24: #{tpu_custom_call.1} parent=1 // pred_region
      %55 = dma.done [#allocation3], 128
    $region25: #{tpu_custom_call.1} parent=1 // pred_fallthru
      _
    // Predicated region
    $region26: #{tpu_custom_call.1} parent=1 // pred_check
      _
    $region27: #{tpu_custom_call.1} parent=1 // pred_check_branch
      %57 = sbr.rel (0) target = $region29
    $region28: #{tpu_custom_call.1} parent=1 // pred_region
      %59 = dma.done [#allocation6], 128
    $region29: #{tpu_custom_call.1} parent=1 // pred_fallthru
      _
    // Predicated region
    $region30: #{tpu_custom_call.1} parent=1 // pred_check
      _
    $region31: #{tpu_custom_call.1} parent=1 // pred_check_branch
      %61 = sbr.rel (0) target = $region33
    $region32: #{tpu_custom_call.1} parent=1 // pred_region
      %63 = dma.done [#allocation6], 2048
    $region33: #{tpu_custom_call.1} parent=1 // pred_fallthru
      _
    %v64 = vld [vmem:[#allocation2] sm:$0xff]
    %65 = vxpose.xlu0.b32.start [1/16] %v64, 128
    %66 = vxpose.xlu0.b32.cont [2/16] 0.0, 128
    %67 = vxpose.xlu0.b32.cont [3/16] 0.0, 128
    %68 = vxpose.xlu0.b32.cont [4/16] 0.0, 128
    %69 = vxpose.xlu0.b32.cont [5/16] 0.0, 128
    %70 = vxpose.xlu0.b32.cont [6/16] 0.0, 128
    %71 = vxpose.xlu0.b32.cont [7/16] 0.0, 128
    %72 = vxpose.xlu0.b32.cont [8/16] 0.0, 128
    %73 = vxpose.xlu0.b32.cont [9/16] 0.0, 128
    %74 = vxpose.xlu0.b32.cont [10/16] 0.0, 128
    %75 = vxpose.xlu0.b32.cont [11/16] 0.0, 128
    %76 = vxpose.xlu0.b32.cont [12/16] 0.0, 128
    %77 = vxpose.xlu0.b32.cont [13/16] 0.0, 128
    %78 = vxpose.xlu0.b32.cont [14/16] 0.0, 128
    %79 = vxpose.xlu0.b32.cont [15/16] 0.0, 128
    %80 = vxpose.xlu0.b32.end [16/16] 0.0, 128
    %v81 = vpop.trf.xlu0
    %v82 = vpop.trf.xlu0
    %v83 = vpop.trf.xlu0
    %v84 = vpop.trf.xlu0
    %v85 = vpop.trf.xlu0
    %v86 = vpop.trf.xlu0
    %v87 = vpop.trf.xlu0
    %v88 = vpop.trf.xlu0
    %v89 = vpop.trf.xlu0
    %v90 = vpop.trf.xlu0
    %v91 = vpop.trf.xlu0
    %v92 = vpop.trf.xlu0
    %v93 = vpop.trf.xlu0
    %v94 = vpop.trf.xlu0
    %v95 = vpop.trf.xlu0
    %v96 = vpop.trf.xlu0
    %v97 = vld [vmem:[#allocation5] sm:$0xff]
    %98 = vxpose.xlu0.b32.start [1/16] %v97, 128
    %99 = vxpose.xlu0.b32.cont [2/16] 0.0, 128
    %100 = vxpose.xlu0.b32.cont [3/16] 0.0, 128
    %101 = vxpose.xlu0.b32.cont [4/16] 0.0, 128
    %102 = vxpose.xlu0.b32.cont [5/16] 0.0, 128
    %103 = vxpose.xlu0.b32.cont [6/16] 0.0, 128
    %104 = vxpose.xlu0.b32.cont [7/16] 0.0, 128
    %105 = vxpose.xlu0.b32.cont [8/16] 0.0, 128
    %106 = vxpose.xlu0.b32.cont [9/16] 0.0, 128
    %107 = vxpose.xlu0.b32.cont [10/16] 0.0, 128
    %108 = vxpose.xlu0.b32.cont [11/16] 0.0, 128
    %109 = vxpose.xlu0.b32.cont [12/16] 0.0, 128
    %110 = vxpose.xlu0.b32.cont [13/16] 0.0, 128
    %111 = vxpose.xlu0.b32.cont [14/16] 0.0, 128
    %112 = vxpose.xlu0.b32.cont [15/16] 0.0, 128
    %113 = vxpose.xlu0.b32.end [16/16] 0.0, 128
    %v114 = vpop.trf.xlu0
    %v115 = vpop.trf.xlu0
    %v116 = vpop.trf.xlu0
    %v117 = vpop.trf.xlu0
    %v118 = vpop.trf.xlu0
    %v119 = vpop.trf.xlu0
    %v120 = vpop.trf.xlu0
    %v121 = vpop.trf.xlu0
    %v122 = vpop.trf.xlu0
    %v123 = vpop.trf.xlu0
    %v124 = vpop.trf.xlu0
    %v125 = vpop.trf.xlu0
    %v126 = vpop.trf.xlu0
    %v127 = vpop.trf.xlu0
    %v128 = vpop.trf.xlu0
    %v129 = vpop.trf.xlu0
    %v134 = vrot.slane %v81, 1
    %v135 = vrot.slane %v81, 2
    %v136 = vrot.slane %v81, 3
    %v137 = vrot.slane %v81, 4
    %v138 = vrot.slane %v81, 5
    %v139 = vrot.slane %v81, 6
    %v140 = vrot.slane %v81, 7
    %v141 = vrot.slane %v82, 1
    %v142 = vrot.slane %v82, 2
    %v143 = vrot.slane %v82, 3
    %v144 = vrot.slane %v82, 4
    %v145 = vrot.slane %v82, 5
    %v146 = vrot.slane %v82, 6
    %v147 = vrot.slane %v82, 7
    %v148 = vrot.slane %v83, 1
    %v149 = vrot.slane %v83, 2
    %v150 = vrot.slane %v83, 3
    %v151 = vrot.slane %v83, 4
    %v152 = vrot.slane %v83, 5
    %v153 = vrot.slane %v83, 6
    %v154 = vrot.slane %v83, 7
    %v155 = vrot.slane %v84, 1
    %v156 = vrot.slane %v84, 2
    %v157 = vrot.slane %v84, 3
    %v158 = vrot.slane %v84, 4
    %v159 = vrot.slane %v84, 5
    %v160 = vrot.slane %v84, 6
    %v161 = vrot.slane %v84, 7
    %v162 = vperm.slane %v81, 0
    %v163 = vperm.slane %v134, 0
    %v164 = vperm.slane %v135, 0
    %v165 = vperm.slane %v136, 0
    %v166 = vperm.slane %v137, 0
    %v167 = vperm.slane %v138, 0
    %v168 = vperm.slane %v139, 0
    %v169 = vperm.slane %v140, 0
    %v170 = vperm.slane %v82, 0
    %v171 = vperm.slane %v141, 0
    %v172 = vperm.slane %v142, 0
    %v173 = vperm.slane %v143, 0
    %v174 = vperm.slane %v144, 0
    %v175 = vperm.slane %v145, 0
    %v176 = vperm.slane %v146, 0
    %v177 = vperm.slane %v147, 0
    %v178 = vperm.slane %v83, 0
    %v179 = vperm.slane %v148, 0
    %v180 = vperm.slane %v149, 0
    %v181 = vperm.slane %v150, 0
    %v182 = vperm.slane %v151, 0
    %v183 = vperm.slane %v152, 0
    %v184 = vperm.slane %v153, 0
    %v185 = vperm.slane %v154, 0
    %v186 = vperm.slane %v84, 0
    %v187 = vperm.slane %v155, 0
    %v188 = vperm.slane %v156, 0
    %v189 = vperm.slane %v157, 0
    %v190 = vperm.slane %v158, 0
    %v191 = vperm.slane %v159, 0
    %v192 = vperm.slane %v160, 0
    %v193 = vperm.slane %v161, 0
    %v226 = vmul.f32 %v162, %v114
    %v227 = vmul.f32 %v162, %v115
    %v228 = vmul.f32 %v162, %v116
    %v229 = vmul.f32 %v162, %v117
    %v230 = vmul.f32 %v163, %v114
    %v231 = vmul.f32 %v163, %v115
    %v232 = vmul.f32 %v163, %v116
    %v233 = vmul.f32 %v163, %v117
    %v234 = vmul.f32 %v164, %v114
    %v235 = vmul.f32 %v164, %v115
    %v236 = vmul.f32 %v164, %v116
    %v237 = vmul.f32 %v164, %v117
    %v238 = vmul.f32 %v165, %v114
    %v239 = vmul.f32 %v165, %v115
    %v240 = vmul.f32 %v165, %v116
    %v241 = vmul.f32 %v165, %v117
    %v242 = vmul.f32 %v166, %v114
    %v243 = vmul.f32 %v166, %v115
    %v244 = vmul.f32 %v166, %v116
    %v245 = vmul.f32 %v166, %v117
    %v246 = vmul.f32 %v167, %v114
    %v247 = vmul.f32 %v167, %v115
    %v248 = vmul.f32 %v167, %v116
    %v249 = vmul.f32 %v167, %v117
    %v250 = vmul.f32 %v168, %v114
    %v251 = vmul.f32 %v168, %v115
    %v252 = vmul.f32 %v168, %v116
    %v253 = vmul.f32 %v168, %v117
    %v254 = vmul.f32 %v169, %v114
    %v255 = vmul.f32 %v169, %v115
    %v256 = vmul.f32 %v169, %v116
    %v257 = vmul.f32 %v169, %v117
    %v258 = vmul.f32 %v170, %v114
    %v259 = vmul.f32 %v170, %v115
    %v260 = vmul.f32 %v170, %v116
    %v261 = vmul.f32 %v170, %v117
    %v262 = vmul.f32 %v171, %v114
    %v263 = vmul.f32 %v171, %v115
    %v264 = vmul.f32 %v171, %v116
    %v265 = vmul.f32 %v171, %v117
    %v266 = vmul.f32 %v172, %v114
    %v267 = vmul.f32 %v172, %v115
    %v268 = vmul.f32 %v172, %v116
    %v269 = vmul.f32 %v172, %v117
    %v270 = vmul.f32 %v173, %v114
    %v271 = vmul.f32 %v173, %v115
    %v272 = vmul.f32 %v173, %v116
    %v273 = vmul.f32 %v173, %v117
    %v274 = vmul.f32 %v174, %v114
    %v275 = vmul.f32 %v174, %v115
    %v276 = vmul.f32 %v174, %v116
    %v277 = vmul.f32 %v174, %v117
    %v278 = vmul.f32 %v175, %v114
    %v279 = vmul.f32 %v175, %v115
    %v280 = vmul.f32 %v175, %v116
    %v281 = vmul.f32 %v175, %v117
    %v282 = vmul.f32 %v176, %v114
    %v283 = vmul.f32 %v176, %v115
    %v284 = vmul.f32 %v176, %v116
    %v285 = vmul.f32 %v176, %v117
    %v286 = vmul.f32 %v177, %v114
    %v287 = vmul.f32 %v177, %v115
    %v288 = vmul.f32 %v177, %v116
    %v289 = vmul.f32 %v177, %v117
    %v290 = vmul.f32 %v178, %v114
    %v291 = vmul.f32 %v178, %v115
    %v292 = vmul.f32 %v178, %v116
    %v293 = vmul.f32 %v178, %v117
    %v294 = vmul.f32 %v179, %v114
    %v295 = vmul.f32 %v179, %v115
    %v296 = vmul.f32 %v179, %v116
    %v297 = vmul.f32 %v179, %v117
    %v298 = vmul.f32 %v180, %v114
    %v299 = vmul.f32 %v180, %v115
    %v300 = vmul.f32 %v180, %v116
    %v301 = vmul.f32 %v180, %v117
    %v302 = vmul.f32 %v181, %v114
    %v303 = vmul.f32 %v181, %v115
    %v304 = vmul.f32 %v181, %v116
    %v305 = vmul.f32 %v181, %v117
    %v306 = vmul.f32 %v182, %v114
    %v307 = vmul.f32 %v182, %v115
    %v308 = vmul.f32 %v182, %v116
    %v309 = vmul.f32 %v182, %v117
    %v310 = vmul.f32 %v183, %v114
    %v311 = vmul.f32 %v183, %v115
    %v312 = vmul.f32 %v183, %v116
    %v313 = vmul.f32 %v183, %v117
    %v314 = vmul.f32 %v184, %v114
    %v315 = vmul.f32 %v184, %v115
    %v316 = vmul.f32 %v184, %v116
    %v317 = vmul.f32 %v184, %v117
    %v318 = vmul.f32 %v185, %v114
    %v319 = vmul.f32 %v185, %v115
    %v320 = vmul.f32 %v185, %v116
    %v321 = vmul.f32 %v185, %v117
    %v322 = vmul.f32 %v186, %v114
    %v323 = vmul.f32 %v186, %v115
    %v324 = vmul.f32 %v186, %v116
    %v325 = vmul.f32 %v186, %v117
    %v326 = vmul.f32 %v187, %v114
    %v327 = vmul.f32 %v187, %v115
    %v328 = vmul.f32 %v187, %v116
    %v329 = vmul.f32 %v187, %v117
    %v330 = vmul.f32 %v188, %v114
    %v331 = vmul.f32 %v188, %v115
    %v332 = vmul.f32 %v188, %v116
    %v333 = vmul.f32 %v188, %v117
    %v334 = vmul.f32 %v189, %v114
    %v335 = vmul.f32 %v189, %v115
    %v336 = vmul.f32 %v189, %v116
    %v337 = vmul.f32 %v189, %v117
    %v338 = vmul.f32 %v190, %v114
    %v339 = vmul.f32 %v190, %v115
    %v340 = vmul.f32 %v190, %v116
    %v341 = vmul.f32 %v190, %v117
    %v342 = vmul.f32 %v191, %v114
    %v343 = vmul.f32 %v191, %v115
    %v344 = vmul.f32 %v191, %v116
    %v345 = vmul.f32 %v191, %v117
    %v346 = vmul.f32 %v192, %v114
    %v347 = vmul.f32 %v192, %v115
    %v348 = vmul.f32 %v192, %v116
    %v349 = vmul.f32 %v192, %v117
    %v350 = vmul.f32 %v193, %v114
    %v351 = vmul.f32 %v193, %v115
    %v352 = vmul.f32 %v193, %v116
    %v353 = vmul.f32 %v193, %v117
    %v354 = vld [vmem:[#allocation7] sm:$0xff]
    %v355 = vld [vmem:[#allocation7 + $0x8] sm:$0xff]
    %v356 = vld [vmem:[#allocation7 + $0x10] sm:$0xff]
    %v357 = vld [vmem:[#allocation7 + $0x18] sm:$0xff]
    %v358 = vld [vmem:[#allocation7 + $0x20] sm:$0xff]
    %v359 = vld [vmem:[#allocation7 + $0x28] sm:$0xff]
    %v360 = vld [vmem:[#allocation7 + $0x30] sm:$0xff]
    %v361 = vld [vmem:[#allocation7 + $0x38] sm:$0xff]
    %v362 = vld [vmem:[#allocation7 + $0x40] sm:$0xff]
    %v363 = vld [vmem:[#allocation7 + $0x48] sm:$0xff]
    %v364 = vld [vmem:[#allocation7 + $0x50] sm:$0xff]
    %v365 = vld [vmem:[#allocation7 + $0x58] sm:$0xff]
    %v366 = vld [vmem:[#allocation7 + $0x60] sm:$0xff]
    %v367 = vld [vmem:[#allocation7 + $0x68] sm:$0xff]
    %v368 = vld [vmem:[#allocation7 + $0x70] sm:$0xff]
    %v369 = vld [vmem:[#allocation7 + $0x78] sm:$0xff]
    %v370 = vld [vmem:[%s3] sm:$0xff]
    %v371 = vld [vmem:[%s3 + $0x8] sm:$0xff]
    %vm372 = vcmask 523264
    %v374 = vsel %vm372, %v370, 0
    %v377 = vsel %vm372, %v371, 0
    %379 = vmatpush.msra.mxu0 0.0
    %380 = vmatpush.msra.mxu0 0.0
    %381 = vmatpush.msra.mxu0 0.0
    %382 = vmatpush.msra.mxu0 0.0
    %383 = vmatpush.msra.mxu0 0.0
    %384 = vmatpush.msra.mxu0 0.0
    %385 = vmatpush.msra.mxu0 0.0
    %386 = vmatpush.msra.mxu0 0.0
    %387 = vmatpush.msra.mxu0 %v117
    %388 = vmatpush.msra.mxu0 %v116
    %389 = vmatpush.msra.mxu0 %v115
    %390 = vmatpush.msra.mxu0 %v114
    %391 = vmatpush.msra.mxu0 %v84
    %392 = vmatpush.msra.mxu0 %v83
    %393 = vmatpush.msra.mxu0 %v82
    %394 = vmatpush.msra.mxu0 %v81
    %395 = vmatmul.f32.gmra.mxu0 %v374
    %v396 = vpop.f32.mrf.mxu0
    %v397 = vadd.f32 0.0, %v396
    %398 = vmatmul.f32.gmra.mxu0 %v377
    %v399 = vpop.f32.mrf.mxu0
    %v400 = vadd.f32 0.0, %v399
    %401 = vdwg.mxu0
    %402 = vmatpush.msra.mxu0 %v241
    %403 = vmatpush.msra.mxu0 %v240
    %404 = vmatpush.msra.mxu0 %v239
    %405 = vmatpush.msra.mxu0 %v238
    %406 = vmatpush.msra.mxu0 %v237
    %407 = vmatpush.msra.mxu0 %v236
    %408 = vmatpush.msra.mxu0 %v235
    %409 = vmatpush.msra.mxu0 %v234
    %410 = vmatpush.msra.mxu0 %v233
    %411 = vmatpush.msra.mxu0 %v232
    %412 = vmatpush.msra.mxu0 %v231
    %413 = vmatpush.msra.mxu0 %v230
    %414 = vmatpush.msra.mxu0 %v229
    %415 = vmatpush.msra.mxu0 %v228
    %416 = vmatpush.msra.mxu0 %v227
    %417 = vmatpush.msra.mxu0 %v226
    %418 = vmatmul.f32.gmra.mxu0 %v354
    %v419 = vpop.f32.mrf.mxu0
    %v420 = vadd.f32 %v397, %v419
    %421 = vmatmul.f32.gmra.mxu0 %v362
    %v422 = vpop.f32.mrf.mxu0
    %v423 = vadd.f32 %v400, %v422
    %424 = vdwg.mxu0
    %425 = vmatpush.msra.mxu0 %v257
    %426 = vmatpush.msra.mxu0 %v256
    %427 = vmatpush.msra.mxu0 %v255
    %428 = vmatpush.msra.mxu0 %v254
    %429 = vmatpush.msra.mxu0 %v253
    %430 = vmatpush.msra.mxu0 %v252
    %431 = vmatpush.msra.mxu0 %v251
    %432 = vmatpush.msra.mxu0 %v250
    %433 = vmatpush.msra.mxu0 %v249
    %434 = vmatpush.msra.mxu0 %v248
    %435 = vmatpush.msra.mxu0 %v247
    %436 = vmatpush.msra.mxu0 %v246
    %437 = vmatpush.msra.mxu0 %v245
    %438 = vmatpush.msra.mxu0 %v244
    %439 = vmatpush.msra.mxu0 %v243
    %440 = vmatpush.msra.mxu0 %v242
    %441 = vmatmul.f32.gmra.mxu0 %v355
    %v442 = vpop.f32.mrf.mxu0
    %v443 = vadd.f32 %v420, %v442
    %444 = vmatmul.f32.gmra.mxu0 %v363
    %v445 = vpop.f32.mrf.mxu0
    %v446 = vadd.f32 %v423, %v445
    %447 = vdwg.mxu0
    %448 = vmatpush.msra.mxu0 %v273
    %449 = vmatpush.msra.mxu0 %v272
    %450 = vmatpush.msra.mxu0 %v271
    %451 = vmatpush.msra.mxu0 %v270
    %452 = vmatpush.msra.mxu0 %v269
    %453 = vmatpush.msra.mxu0 %v268
    %454 = vmatpush.msra.mxu0 %v267
    %455 = vmatpush.msra.mxu0 %v266
    %456 = vmatpush.msra.mxu0 %v265
    %457 = vmatpush.msra.mxu0 %v264
    %458 = vmatpush.msra.mxu0 %v263
    %459 = vmatpush.msra.mxu0 %v262
    %460 = vmatpush.msra.mxu0 %v261
    %461 = vmatpush.msra.mxu0 %v260
    %462 = vmatpush.msra.mxu0 %v259
    %463 = vmatpush.msra.mxu0 %v258
    %464 = vmatmul.f32.gmra.mxu0 %v356
    %v465 = vpop.f32.mrf.mxu0
    %v466 = vadd.f32 %v443, %v465
    %467 = vmatmul.f32.gmra.mxu0 %v364
    %v468 = vpop.f32.mrf.mxu0
    %v469 = vadd.f32 %v446, %v468
    %470 = vdwg.mxu0
    %471 = vmatpush.msra.mxu0 %v289
    %472 = vmatpush.msra.mxu0 %v288
    %473 = vmatpush.msra.mxu0 %v287
    %474 = vmatpush.msra.mxu0 %v286
    %475 = vmatpush.msra.mxu0 %v285
    %476 = vmatpush.msra.mxu0 %v284
    %477 = vmatpush.msra.mxu0 %v283
    %478 = vmatpush.msra.mxu0 %v282
    %479 = vmatpush.msra.mxu0 %v281
    %480 = vmatpush.msra.mxu0 %v280
    %481 = vmatpush.msra.mxu0 %v279
    %482 = vmatpush.msra.mxu0 %v278
    %483 = vmatpush.msra.mxu0 %v277
    %484 = vmatpush.msra.mxu0 %v276
    %485 = vmatpush.msra.mxu0 %v275
    %486 = vmatpush.msra.mxu0 %v274
    %487 = vmatmul.f32.gmra.mxu0 %v357
    %v488 = vpop.f32.mrf.mxu0
    %v489 = vadd.f32 %v466, %v488
    %490 = vmatmul.f32.gmra.mxu0 %v365
    %v491 = vpop.f32.mrf.mxu0
    %v492 = vadd.f32 %v469, %v491
    %493 = vdwg.mxu0
    %494 = vmatpush.msra.mxu0 %v305
    %495 = vmatpush.msra.mxu0 %v304
    %496 = vmatpush.msra.mxu0 %v303
    %497 = vmatpush.msra.mxu0 %v302
    %498 = vmatpush.msra.mxu0 %v301
    %499 = vmatpush.msra.mxu0 %v300
    %500 = vmatpush.msra.mxu0 %v299
    %501 = vmatpush.msra.mxu0 %v298
    %502 = vmatpush.msra.mxu0 %v297
    %503 = vmatpush.msra.mxu0 %v296
    %504 = vmatpush.msra.mxu0 %v295
    %505 = vmatpush.msra.mxu0 %v294
    %506 = vmatpush.msra.mxu0 %v293
    %507 = vmatpush.msra.mxu0 %v292
    %508 = vmatpush.msra.mxu0 %v291
    %509 = vmatpush.msra.mxu0 %v290
    %510 = vmatmul.f32.gmra.mxu0 %v358
    %v511 = vpop.f32.mrf.mxu0
    %v512 = vadd.f32 %v489, %v511
    %513 = vmatmul.f32.gmra.mxu0 %v366
    %v514 = vpop.f32.mrf.mxu0
    %v515 = vadd.f32 %v492, %v514
    %516 = vdwg.mxu0
    %517 = vmatpush.msra.mxu0 %v321
    %518 = vmatpush.msra.mxu0 %v320
    %519 = vmatpush.msra.mxu0 %v319
    %520 = vmatpush.msra.mxu0 %v318
    %521 = vmatpush.msra.mxu0 %v317
    %522 = vmatpush.msra.mxu0 %v316
    %523 = vmatpush.msra.mxu0 %v315
    %524 = vmatpush.msra.mxu0 %v314
    %525 = vmatpush.msra.mxu0 %v313
    %526 = vmatpush.msra.mxu0 %v312
    %527 = vmatpush.msra.mxu0 %v311
    %528 = vmatpush.msra.mxu0 %v310
    %529 = vmatpush.msra.mxu0 %v309
    %530 = vmatpush.msra.mxu0 %v308
    %531 = vmatpush.msra.mxu0 %v307
    %532 = vmatpush.msra.mxu0 %v306
    %533 = vmatmul.f32.gmra.mxu0 %v359
    %v534 = vpop.f32.mrf.mxu0
    %v535 = vadd.f32 %v512, %v534
    %536 = vmatmul.f32.gmra.mxu0 %v367
    %v537 = vpop.f32.mrf.mxu0
    %v538 = vadd.f32 %v515, %v537
    %539 = vdwg.mxu0
    %540 = vmatpush.msra.mxu0 %v337
    %541 = vmatpush.msra.mxu0 %v336
    %542 = vmatpush.msra.mxu0 %v335
    %543 = vmatpush.msra.mxu0 %v334
    %544 = vmatpush.msra.mxu0 %v333
    %545 = vmatpush.msra.mxu0 %v332
    %546 = vmatpush.msra.mxu0 %v331
    %547 = vmatpush.msra.mxu0 %v330
    %548 = vmatpush.msra.mxu0 %v329
    %549 = vmatpush.msra.mxu0 %v328
    %550 = vmatpush.msra.mxu0 %v327
    %551 = vmatpush.msra.mxu0 %v326
    %552 = vmatpush.msra.mxu0 %v325
    %553 = vmatpush.msra.mxu0 %v324
    %554 = vmatpush.msra.mxu0 %v323
    %555 = vmatpush.msra.mxu0 %v322
    %556 = vmatmul.f32.gmra.mxu0 %v360
    %v557 = vpop.f32.mrf.mxu0
    %v558 = vadd.f32 %v535, %v557
    %559 = vmatmul.f32.gmra.mxu0 %v368
    %v560 = vpop.f32.mrf.mxu0
    %v561 = vadd.f32 %v538, %v560
    %562 = vdwg.mxu0
    %563 = vmatpush.msra.mxu0 %v353
    %564 = vmatpush.msra.mxu0 %v352
    %565 = vmatpush.msra.mxu0 %v351
    %566 = vmatpush.msra.mxu0 %v350
    %567 = vmatpush.msra.mxu0 %v349
    %568 = vmatpush.msra.mxu0 %v348
    %569 = vmatpush.msra.mxu0 %v347
    %570 = vmatpush.msra.mxu0 %v346
    %571 = vmatpush.msra.mxu0 %v345
    %572 = vmatpush.msra.mxu0 %v344
    %573 = vmatpush.msra.mxu0 %v343
    %574 = vmatpush.msra.mxu0 %v342
    %575 = vmatpush.msra.mxu0 %v341
    %576 = vmatpush.msra.mxu0 %v340
    %577 = vmatpush.msra.mxu0 %v339
    %578 = vmatpush.msra.mxu0 %v338
    %579 = vmatmul.f32.gmra.mxu0 %v361
    %v580 = vpop.f32.mrf.mxu0
    %v581 = vadd.f32 %v558, %v580
    %582 = vmatmul.f32.gmra.mxu0 %v369
    %v583 = vpop.f32.mrf.mxu0
    %v584 = vadd.f32 %v561, %v583
    %585 = vdwg.mxu0
    %v586 = vld [vmem:[%s4] sm:$0xff]
    %v587 = vld [vmem:[%s4 + $0x8] sm:$0xff]
    %589 = vset.pattern.permute.xlu0 0
    %590 = vperm.xlu0 %589, %v586
    %v591 = vpop.permute.xlu0 %590
    %594 = vset.pattern.permute.xlu0 0
    %595 = vperm.xlu0 %594, %v587
    %v596 = vpop.permute.xlu0 %595
    %v598 = vadd.f32 %v581, %v591
    %v599 = vadd.f32 %v584, %v596
    %v600 = vmax.f32 %v598, 0.0
    %v601 = vmax.f32 %v599, 0.0
    %602 = vxpose.xlu0.b32.start [1/16] %v600, 128
    %603 = vxpose.xlu0.b32.cont [2/16] %v601, 128
    %604 = vxpose.xlu0.b32.cont [3/16] 0.0, 128
    %605 = vxpose.xlu0.b32.cont [4/16] 0.0, 128
    %606 = vxpose.xlu0.b32.cont [5/16] 0.0, 128
    %607 = vxpose.xlu0.b32.cont [6/16] 0.0, 128
    %608 = vxpose.xlu0.b32.cont [7/16] 0.0, 128
    %609 = vxpose.xlu0.b32.cont [8/16] 0.0, 128
    %610 = vxpose.xlu0.b32.cont [9/16] 0.0, 128
    %611 = vxpose.xlu0.b32.cont [10/16] 0.0, 128
    %612 = vxpose.xlu0.b32.cont [11/16] 0.0, 128
    %613 = vxpose.xlu0.b32.cont [12/16] 0.0, 128
    %614 = vxpose.xlu0.b32.cont [13/16] 0.0, 128
    %615 = vxpose.xlu0.b32.cont [14/16] 0.0, 128
    %616 = vxpose.xlu0.b32.cont [15/16] 0.0, 128
    %617 = vxpose.xlu0.b32.end [16/16] 0.0, 128
    %v618 = vpop.trf.xlu0
    %v619 = vpop.trf.xlu0
    %v620 = vpop.trf.xlu0
    %v621 = vpop.trf.xlu0
    %v622 = vpop.trf.xlu0
    %v623 = vpop.trf.xlu0
    %v624 = vpop.trf.xlu0
    %v625 = vpop.trf.xlu0
    %v626 = vpop.trf.xlu0
    %v627 = vpop.trf.xlu0
    %v628 = vpop.trf.xlu0
    %v629 = vpop.trf.xlu0
    %v630 = vpop.trf.xlu0
    %v631 = vpop.trf.xlu0
    %v632 = vpop.trf.xlu0
    %v633 = vpop.trf.xlu0
    %vm634 = vcmask 130048
    %635 = vst.msk [vmem:[#allocation8] sm:$0xff] %vm634, %v618
    // Predicated region
    $region34: #{tpu_custom_call.1} parent=1 // pred_check
      _
    $region35: #{tpu_custom_call.1} parent=1 // pred_check_branch
      %637 = sbr.rel (0) target = $region37
    $region36: #{tpu_custom_call.1} parent=1 // pred_region
      %639 = vsyncadd [#allocation4], 0
      %s641 = sshll.u32 [#allocation8], 4
      %s642 = int_to_ptr.vmem [resolvable:$true] %s641
      %s643 = sshll.u32 %s5, 4
      %s644 = int_to_ptr.hbm [resolvable:$true] %s643
      %646 = dma.vmem_to_hbm [thread:$0]  %s642, 128, %s644, [#allocation4]
    $region37: #{tpu_custom_call.1} parent=1 // pred_fallthru
      _
    // Predicated region
    $region38: #{tpu_custom_call.1} parent=1 // pred_check
      _
    $region39: #{tpu_custom_call.1} parent=1 // pred_check_branch
      %648 = sbr.rel (0) target = $region41
    $region40: #{tpu_custom_call.1} parent=1 // pred_region
      %650 = dma.done [#allocation4], 128
    $region41: #{tpu_custom_call.1} parent=1 // pred_fallthru
      _
    %651 = vsyncpa [#allocation3], 1
    %652 = vsyncpa [#allocation6], 1
    %653 = vsyncpa [#allocation4], 1

</llo_original>
